<compile_context>
chip_gen: v7x
topology: tpu7x:2x2x1
jax: 0.10.0
libtpu: 0.0.40
codegen_flags: <defaults>
</compile_context>

<pallas_src>
import jax
import jax.numpy as jnp
from jax.experimental import pallas as pl
from jax.experimental.pallas import tpu as pltpu


# ----------------------------- VMEM budgeting -----------------------------

def _vmem_limits():
    """Returns (scoped_vmem_limit_bytes, per-block byte budget)."""
    phys = 64 * 1024 * 1024  # conservative default = v7x (smallest VMEM)
    try:
        info = pltpu.get_tpu_info()
        phys = int(getattr(info, "vmem_capacity_bytes", phys))
    except Exception:
        pass
    limit = min(phys * 3 // 4, 96 * 1024 * 1024)  # scoped limit, headroom kept
    budget = int(limit * 0.85)                    # double-buffered blocks + f32 temps
    return int(limit), budget


def _pick_lane_tile(d, rows, per_elem_bytes, budget, cap=2048):
    """Largest multiple-of-128 lane tile whose (rows, tile) footprint fits the
    budget; capped below d (when d > 128) so the lane grid keeps >= 2 steps."""
    if d <= 128:
        return d
    tn = min(cap, ((d - 1) // 128) * 128)  # multiple of 128, strictly < d
    while tn > 128 and rows * tn * per_elem_bytes > budget:
        tn -= 128
    return tn


# ------------------------------- kernels ----------------------------------

def _softmax_full_n_kernel(x_ref, o_ref):
    """All N rows of this lane tile are resident: single cross-sublane reduce."""
    x = x_ref[...].astype(jnp.float32)
    c = jnp.max(x, axis=0, keepdims=True)
    e = jnp.exp(x - c)
    s = jnp.sum(e, axis=0, keepdims=True)
    # Exact divide (matches the reference bit-for-bit up to summation order).
    o_ref[...] = (e / s).astype(o_ref.dtype)


def _make_stats_kernel(tm, n_rows):
    """Pass 1 of the tall-N path: online per-lane max / rescaled sum over N."""
    needs_mask = (n_rows % tm) != 0

    def stats_kernel(x_ref, m_ref, s_ref):
        i = pl.program_id(1)  # N (reduction) axis, last in the grid

        @pl.when(i == 0)
        def _init():
            m_ref[...] = jnp.full(m_ref.shape, -jnp.inf, jnp.float32)
            s_ref[...] = jnp.zeros(s_ref.shape, jnp.float32)

        x = x_ref[...].astype(jnp.float32)
        if needs_mask:  # mask padded rows of the last partial N tile
            rows = jax.lax.broadcasted_iota(jnp.int32, x.shape, 0) + i * tm
            x = jnp.where(rows < n_rows, x, -jnp.inf)

        m_prev = m_ref[...]
        m_new = jnp.maximum(m_prev, jnp.max(x, axis=0, keepdims=True))
        s_ref[...] = (s_ref[...] * jnp.exp(m_prev - m_new)
                      + jnp.sum(jnp.exp(x - m_new), axis=0, keepdims=True))
        m_ref[...] = m_new

    return stats_kernel


def _normalize_kernel(x_ref, m_ref, s_ref, o_ref):
    """Pass 2 of the tall-N path: elementwise exp(x - m) / s (exact divide)."""
    x = x_ref[...].astype(jnp.float32)
    e = jnp.exp(x - m_ref[...])
    o_ref[...] = (e / s_ref[...]).astype(o_ref.dtype)


# ------------------------------- wrapper -----------------------------------

def softmax_stable(x, *, block_budget_bytes=None):
    """Stable softmax along axis 0 (matches the PyTorch module).

    Accepts any rank >= 1; trailing axes are flattened into one lane axis for
    the kernel and restored afterwards (pure reshape glue, no data movement).
    """
    orig_shape = x.shape
    n = int(orig_shape[0])
    d = 1
    for sdim in orig_shape[1:]:
        d *= int(sdim)
    x2 = x.reshape(n, d)
    isize = jnp.dtype(x.dtype).itemsize

    vmem_limit, budget = _vmem_limits()
    if block_budget_bytes is not None:
        budget = int(block_budget_bytes)

    # Per-element VMEM cost: double-buffered in + out (io dtype) + ~2 f32 temps.
    per_elem = 4 * isize + 8

    min_tn = d if d <= 128 else 128
    if n * min_tn * per_elem <= budget:
        # ---- fast path: full N per lane tile, 1-D lane grid ----
        tn = _pick_lane_tile(d, n, per_elem, budget)
        out = pl.pallas_call(
            _softmax_full_n_kernel,
            out_shape=jax.ShapeDtypeStruct((n, d), x.dtype),
            grid_spec=pltpu.PrefetchScalarGridSpec(
                num_scalar_prefetch=0,
                grid=(pl.cdiv(d, tn),),
                in_specs=[pl.BlockSpec((n, tn), lambda j: (0, j))],
                out_specs=pl.BlockSpec((n, tn), lambda j: (0, j)),
            ),
            compiler_params=pltpu.CompilerParams(
                dimension_semantics=("parallel",),
                vmem_limit_bytes=vmem_limit,
            ),
        )(x2)
        return out.reshape(orig_shape)

    # ---- tall-N path: two streaming passes with bounded (tm, tl) tiles ----
    tl = d if d <= 128 else min(512, ((d - 1) // 128) * 128)
    if n < 8:
        tm = n
    else:
        tm_cap = min(4096, (n // 8) * 8)
        tm_fit = (budget // (tl * per_elem)) // 8 * 8
        tm = max(8, min(tm_cap, tm_fit))
    num_n = pl.cdiv(n, tm)
    num_d = pl.cdiv(d, tl)

    # Pass 1: per-lane running max / sum over all N tiles (reduction axis last).
    m, s = pl.pallas_call(
        _make_stats_kernel(tm, n),
        out_shape=(jax.ShapeDtypeStruct((1, d), jnp.float32),
                   jax.ShapeDtypeStruct((1, d), jnp.float32)),
        grid_spec=pltpu.PrefetchScalarGridSpec(
            num_scalar_prefetch=0,
            grid=(num_d, num_n),
            in_specs=[pl.BlockSpec((tm, tl), lambda j, i: (i, j))],
            out_specs=[pl.BlockSpec((1, tl), lambda j, i: (0, j)),
                       pl.BlockSpec((1, tl), lambda j, i: (0, j))],
        ),
        compiler_params=pltpu.CompilerParams(
            dimension_semantics=("parallel", "arbitrary"),
            vmem_limit_bytes=vmem_limit,
        ),
    )(x2)

    # Pass 2: normalize every tile (fully parallel streaming).
    out = pl.pallas_call(
        _normalize_kernel,
        out_shape=jax.ShapeDtypeStruct((n, d), x.dtype),
        grid_spec=pltpu.PrefetchScalarGridSpec(
            num_scalar_prefetch=0,
            grid=(num_n, num_d),
            in_specs=[pl.BlockSpec((tm, tl), lambda i, j: (i, j)),
                      pl.BlockSpec((1, tl), lambda i, j: (0, j)),
                      pl.BlockSpec((1, tl), lambda i, j: (0, j))],
            out_specs=pl.BlockSpec((tm, tl), lambda i, j: (i, j)),
        ),
        compiler_params=pltpu.CompilerParams(
            dimension_semantics=("parallel", "parallel"),
            vmem_limit_bytes=vmem_limit,
        ),
    )(x2, m, s)
    return out.reshape(orig_shape)


def _reference(x):
    c = jnp.max(x, axis=0)
    e = jnp.exp(x - c)
    return e / jnp.sum(e, axis=0)


if __name__ == "__main__":
    key = jax.random.PRNGKey(0)
    k1, k2, k3 = jax.random.split(key, 3)

    # Primary: small shape consistent with the module's forward (seq=8, hidden=32).
    x = jax.random.normal(k1, (8, 32), dtype=jnp.float32)
    y = jax.block_until_ready(softmax_stable(x))
    y_ref = _reference(x)
    assert y.shape == x.shape
    assert y.dtype == x.dtype
    assert jnp.allclose(y, y_ref, atol=1e-5, rtol=1e-5)
    assert jnp.allclose(jnp.sum(y, axis=0), jnp.ones((32,), jnp.float32), atol=1e-5)

    # Multi-tile lane path (non-multiple-of-tile D -> partial last lane tile).
    x_b = jax.random.normal(k2, (16, 640), dtype=jnp.float32)
    y_b = jax.block_until_ready(softmax_stable(x_b))
    assert jnp.allclose(y_b, _reference(x_b), atol=1e-5, rtol=1e-5)

    # Tall-N two-pass path (forced with a tiny block budget): exercises the
    # online-stats kernel, row masking, and partial lane tiles.
    x_c = jax.random.normal(k3, (50, 200), dtype=jnp.float32)
    y_c = jax.block_until_ready(softmax_stable(x_c, block_budget_bytes=1))
    assert jnp.allclose(y_c, _reference(x_c), atol=1e-5, rtol=1e-5)

    print("KERNEL_OK")
</pallas_src>

<mosaic_0001>
module attributes {stable_mosaic.version = 11 : i64} {
  func.func @_softmax_full_n_kernel(%arg0: i32, %arg1: memref<8x32xf32, #tpu.memory_space<vmem>>, %arg2: memref<8x32xf32, #tpu.memory_space<vmem>>) attributes {dimension_semantics = [#tpu.dimension_semantics<parallel>], iteration_bounds = array<i64: 1>, scalar_prefetch = 0 : i64, scratch_operands = 0 : i64, tpu.core_type = #tpu.core_type<tc>, window_params = [{transform_indices = @transform_0, window_bounds = array<i64: 8, 32>}, {transform_indices = @transform_1, window_bounds = array<i64: 8, 32>}]} {
    %c0 = arith.constant 0 : index
    %c0_0 = arith.constant 0 : index
    %0 = vector.load %arg1[%c0, %c0_0] : memref<8x32xf32, #tpu.memory_space<vmem>>, vector<8x32xf32>
    %cst = arith.constant dense<0xFF800000> : vector<32xf32>
    %1 = vector.multi_reduction <maximumf>, %0, %cst [0] : vector<8x32xf32> to vector<32xf32>
    %2 = vector.shape_cast %1 : vector<32xf32> to vector<1x32xf32>
    %3 = vector.broadcast %2 : vector<1x32xf32> to vector<8x32xf32>
    %4 = arith.subf %0, %3 : vector<8x32xf32>
    %5 = math.exp %4 : vector<8x32xf32>
    %cst_1 = arith.constant dense<0.000000e+00> : vector<32xf32>
    %6 = vector.multi_reduction <add>, %5, %cst_1 [0] : vector<8x32xf32> to vector<32xf32>
    %7 = vector.shape_cast %6 : vector<32xf32> to vector<1x32xf32>
    %8 = vector.broadcast %7 : vector<1x32xf32> to vector<8x32xf32>
    %9 = arith.divf %5, %8 : vector<8x32xf32>
    %c0_2 = arith.constant 0 : index
    %c0_3 = arith.constant 0 : index
    %10 = vector.load %arg2[%c0_2, %c0_3] : memref<8x32xf32, #tpu.memory_space<vmem>>, vector<8x32xf32>
    tpu.vector_store %arg2[%c0_2, %c0_3], %9 {strides = array<i32>} : memref<8x32xf32, #tpu.memory_space<vmem>>, vector<8x32xf32>,
    return
  }
  func.func @transform_0(%arg0: i32) -> (i32, i32) {
    %c0_i32 = arith.constant 0 : i32
    %c0_i32_0 = arith.constant 0 : i32
    return %c0_i32, %arg0 : i32, i32
  }
  func.func @transform_1(%arg0: i32) -> (i32, i32) {
    %c0_i32 = arith.constant 0 : i32
    %c0_i32_0 = arith.constant 0 : i32
    return %c0_i32, %arg0 : i32, i32
  }
}

</mosaic_0001>

<llo_original>
// kernel: tpu_custom_call.1
$region0: #{tpu_custom_call.1}
  #allocation0 [shape = 'u32[]', space=smem, size = 0x4, offset = 0x4, fixed_abs, tag = 'smem constant byte address 0x4 - core index']
  #allocation1 [shape = 'u32[144,128]{1,0:T(1,128)}', space=vmem, size = 0x12000, scoped, tag = 'internal scratch']
  %s0 = inlined_call_operand.hbm [shape: f32[8,32], index: 0, kind: input, shape index: {}]
  %s1 = inlined_call_operand.hbm [shape: f32[8,32], index: 1, kind: output, shape index: {}]
  %s2 = sld [smem:[#allocation0]]
  $region18: #{tpu_custom_call.1} parent=0
    _
  %s4 = ssub.s32 1, %s2
  %s5 = scalar_select 0, %s4, %s2
  $region1: #{tpu_custom_call.1} parent=0
    #allocation2 [shape = 'u8[4096]{0}', space=vmem, size = 0x1000, scoped, tag = 'input window, operand 0, single buffered']
    #allocation3 [shape = 's32[1]{0}', space=sflag, size = 0x4, scoped, tag = 'scoped memory for tpu_custom_call.1']
    #allocation4 [shape = 's32[1]{0}', space=sflag, size = 0x4, scoped, tag = 'scoped memory for tpu_custom_call.1']
    #allocation5 [shape = 'u8[4096]{0}', space=vmem, size = 0x1000, scoped, tag = 'output window, operand 0, single buffered']
    %6 = vsyncpa [#allocation3], 0
    %7 = vsyncpa [#allocation4], 0
    // Predicated region
    $region2: #{tpu_custom_call.1} parent=1 // pred_check
      _
    $region3: #{tpu_custom_call.1} parent=1 // pred_check_branch
      %9 = sbr.rel (0) target = $region5
    $region4: #{tpu_custom_call.1} parent=1 // pred_region
      %s11 = ssub.s32 128, 128
      %12 = vsyncadd [#allocation3], %s11
      %s14 = sshll.u32 [#allocation2], 4
      %s15 = int_to_ptr.vmem [resolvable:$true] %s14
      %17 = dma.hbm_to_vmem [thread:$0]  %s0, 128, %s15, [#allocation3]
    $region5: #{tpu_custom_call.1} parent=1 // pred_fallthru
      _
    // Predicated region
    $region6: #{tpu_custom_call.1} parent=1 // pred_check
      _
    $region7: #{tpu_custom_call.1} parent=1 // pred_check_branch
      %19 = sbr.rel (0) target = $region9
    $region8: #{tpu_custom_call.1} parent=1 // pred_region
      %20 = dma.done [#allocation3], 128
    $region9: #{tpu_custom_call.1} parent=1 // pred_fallthru
      _
    %v21 = vld [vmem:[#allocation2] sm:$0xff]
    %vm22 = vcmask 261120
    %v23 = vsel %vm22, %v21, -inf
    %v24 = vrot.slane %v23, 4
    %v25 = vmax.f32 %v23, %v24
    %v26 = vrot.slane %v25, 2
    %v27 = vmax.f32 %v25, %v26
    %v28 = vrot.slane %v27, 1
    %v29 = vmax.f32 %v27, %v28
    %v30 = vsub.f32 %v21, %v29
    %v31 = vmul.f32 %v30, 1.442695
    %v32 = vpow.pop %v31
    %v33 = vsel %vm22, %v32, 0.0
    %v34 = vrot.slane %v33, 4
    %v35 = vadd.f32 %v33, %v34
    %v36 = vrot.slane %v35, 2
    %v37 = vadd.f32 %v35, %v36
    %v38 = vrot.slane %v37, 1
    %v39 = vadd.f32 %v37, %v38
    %v40 = vrcp.pop %v39
    %v41 = vmul.f32 %v32, %v40
    %42 = vst.msk [vmem:[#allocation5] sm:$0xff] %vm22, %v41
    // Predicated region
    $region10: #{tpu_custom_call.1} parent=1 // pred_check
      _
    $region11: #{tpu_custom_call.1} parent=1 // pred_check_branch
      %44 = sbr.rel (0) target = $region13
    $region12: #{tpu_custom_call.1} parent=1 // pred_region
      %s46 = ssub.s32 128, 128
      %47 = vsyncadd [#allocation4], %s46
      %s49 = sshll.u32 [#allocation5], 4
      %s50 = int_to_ptr.vmem [resolvable:$true] %s49
      %52 = dma.vmem_to_hbm [thread:$0]  %s50, 128, %s1, [#allocation4]
    $region13: #{tpu_custom_call.1} parent=1 // pred_fallthru
      _
    // Predicated region
    $region14: #{tpu_custom_call.1} parent=1 // pred_check
      _
    $region15: #{tpu_custom_call.1} parent=1 // pred_check_branch
      %54 = sbr.rel (0) target = $region17
    $region16: #{tpu_custom_call.1} parent=1 // pred_region
      %55 = dma.done [#allocation4], 128
    $region17: #{tpu_custom_call.1} parent=1 // pred_fallthru
      _
    %56 = vsyncpa [#allocation3], 1
    %57 = vsyncpa [#allocation4], 1

</llo_original>
